<compile_context>
chip_gen: v7x
topology: tpu7x:2x2x1
jax: 0.10.0
libtpu: 0.0.40
codegen_flags: <defaults>
</compile_context>

<pallas_src>
import functools
import numpy as np
import jax
import jax.numpy as jnp
from jax import lax
from jax.experimental import pallas as pl
from jax.experimental.pallas import tpu as pltpu

# ---------------- sizes ----------------
B, V, E, K, L = 8, 64, 32, 16, 4
BN_EPS = 1e-3


# ---------------- small in-kernel helpers ----------------
def _softplus(x):
    return jnp.logaddexp(x, 0.0)


def _softmax(x):
    m = jnp.max(x, axis=-1, keepdims=True)
    e = jnp.exp(x - m)
    return e / jnp.sum(e, axis=-1, keepdims=True)


def _bn_train(x, bias):
    # BatchNorm1d, training mode, weight frozen to 1.0, eps=1e-3.
    mu = jnp.mean(x, axis=0, keepdims=True)
    var = jnp.mean((x - mu) ** 2, axis=0, keepdims=True)
    return (x - mu) * lax.rsqrt(var + BN_EPS) + bias


# ---------------- single fused kernel ----------------
def scholar_fused_kernel(
        # inputs
        x_ref, y_ref, eps_ref,
        wembT_ref, wml_x_ref, wml_y_ref, b_ml_ref, bn_ml_b_ref,
        wbetaT_ref, b_beta_ref, bn_eta_b_ref,
        wcls0_ref, bcls0_ref, wcls1_ref, bcls1_ref,
        pmean_ref, plogvar_ref, pinvvar_ref,
        # outputs
        theta_ref, xrec_ref, yrec_ref, stats_ref,
        *, n_topics, eta_bn_prop, var_scale):
    f32 = jnp.float32
    X = x_ref[...]
    Y = y_ref[...]

    # ----- encoder: en0 = [X @ W_emb^T, Y]; mean & logvar projections fused
    # into a single (.., 2K) contraction (weights pre-concatenated on host) ---
    hx = _softplus(jnp.dot(X, wembT_ref[...], preferred_element_type=f32))
    hy = _softplus(Y)
    # TODO(synk): encoder_dropout_layer (p=0.2) -> identity.
    ml = (jnp.dot(hx, wml_x_ref[...], preferred_element_type=f32)
          + jnp.dot(hy, wml_y_ref[...], preferred_element_type=f32)
          + b_ml_ref[...])
    # per-feature BN over the batch == separate mean-BN / logvar-BN layers
    ml_bn = _bn_train(ml, bn_ml_b_ref[...])
    mean_bn = ml_bn[:, :n_topics]
    logvar_bn = ml_bn[:, n_topics:]

    # ----- reparameterization -----
    post_var = jnp.exp(logvar_bn)
    eps = eps_ref[...]
    if var_scale != 1.0:
        eps = eps * var_scale
    z = mean_bn + jnp.sqrt(post_var) * eps

    # ----- decoder (statically specialized on eta_bn_prop) -----
    # TODO(synk): z_dropout_layer (p=0.2) -> identity.
    theta = _softmax(z)
    eta = jnp.dot(theta, wbetaT_ref[...], preferred_element_type=f32) + b_beta_ref[...]
    if eta_bn_prop == 1.0:
        xrec = _softmax(_bn_train(eta, bn_eta_b_ref[...]))
    elif eta_bn_prop == 0.0:
        xrec = _softmax(eta)
    else:
        xrec = (eta_bn_prop * _softmax(_bn_train(eta, bn_eta_b_ref[...]))
                + (1.0 - eta_bn_prop) * _softmax(eta))

    # ----- classifier (n_labels > 0, classifier_layers == 1) -----
    h = _softplus(jnp.dot(theta, wcls0_ref[...], preferred_element_type=f32)
                  + bcls0_ref[...])
    logits = jnp.dot(h, wcls1_ref[...], preferred_element_type=f32) + bcls1_ref[...]
    yrec = _softmax(logits)

    # ----- ELBO loss, reduced over the batch in-kernel -----
    NL = -jnp.sum(X * jnp.log(xrec + 1e-10), axis=1, keepdims=True)
    NL = NL - jnp.sum(Y * jnp.log(yrec + 1e-10), axis=1, keepdims=True)
    pinv = pinvvar_ref[...]                      # exp(-prior_logvar), host-precomputed
    var_div = post_var * pinv
    diff = mean_bn - pmean_ref[...]
    diff_term = diff * diff * pinv
    logvar_div = plogvar_ref[...] - logvar_bn
    KLD = 0.5 * (jnp.sum(var_div + diff_term + logvar_div, axis=1, keepdims=True)
                 - float(n_topics))

    inv_b = 1.0 / X.shape[0]
    loss_m = jnp.sum(NL + KLD) * inv_b
    nl_m = jnp.sum(NL) * inv_b
    kld_m = jnp.sum(KLD) * inv_b

    # ----- outputs -----
    theta_ref[...] = theta
    xrec_ref[...] = xrec
    yrec_ref[...] = yrec
    lane = lax.broadcasted_iota(jnp.int32, stats_ref.shape, 1)
    stats_ref[...] = jnp.where(lane == 0, loss_m,
                     jnp.where(lane == 1, nl_m,
                     jnp.where(lane == 2, kld_m, 0.0)))


# ---------------- wrapper: one pallas_call for the whole forward ----------------
def scholar_forward(params, X, Y, noise_eps, eta_bn_prop=1.0, var_scale=1.0):
    vmem = lambda: pl.BlockSpec(memory_space=pltpu.MemorySpace.VMEM)
    kernel = functools.partial(scholar_fused_kernel,
                               n_topics=K,
                               eta_bn_prop=float(eta_bn_prop),
                               var_scale=float(var_scale))
    theta, X_recon, Y_recon, stats = pl.pallas_call(
        kernel,
        out_shape=(jax.ShapeDtypeStruct((B, K), jnp.float32),
                   jax.ShapeDtypeStruct((B, V), jnp.float32),
                   jax.ShapeDtypeStruct((B, L), jnp.float32),
                   jax.ShapeDtypeStruct((1, 128), jnp.float32)),
        in_specs=[vmem() for _ in range(18)],
        out_specs=(vmem(), vmem(), vmem(), vmem()),
    )(X, Y, noise_eps,
      params['w_emb_T'], params['w_ml_x'], params['w_ml_y'],
      params['b_ml'], params['bn_ml_bias'],
      params['w_beta_T'], params['b_beta'], params['bn_eta_bias'],
      params['w_cls0'], params['b_cls0'], params['w_cls1'], params['b_cls1'],
      params['prior_mean'], params['prior_logvar'], params['prior_inv_var'])

    loss, NL, KLD = stats[0, 0], stats[0, 1], stats[0, 2]
    # do_average=True
    return theta, X_recon, Y_recon, (loss, NL, KLD)


# ---------------- deterministic parameter construction ----------------
def make_params(key):
    ks = jax.random.split(key, 12)

    def xavier(k, fan_out, fan_in):
        bound = float(np.sqrt(6.0 / (fan_in + fan_out)))
        return jax.random.uniform(k, (fan_out, fan_in), jnp.float32, -bound, bound)

    def linear_default(kw, kb, fan_out, fan_in):
        bound = float(1.0 / np.sqrt(fan_in))
        w = jax.random.uniform(kw, (fan_out, fan_in), jnp.float32, -bound, bound)
        b = jax.random.uniform(kb, (fan_out,), jnp.float32, -bound, bound)
        return w, b

    # embeddings_x_layer: Linear(V, E, bias=False), xavier_uniform
    w_emb = xavier(ks[0], E, V)                       # torch weight shape (E, V)
    # mean / logvar layers: Linear(E + L, K)
    w_mean, b_mean = linear_default(ks[1], ks[2], K, E + L)
    w_logvar, b_logvar = linear_default(ks[3], ks[4], K, E + L)
    # beta_layer: Linear(K, V), xavier_uniform weight, default bias
    w_beta = xavier(ks[5], V, K)
    b_beta = jax.random.uniform(ks[6], (V,), jnp.float32,
                                -1.0 / np.sqrt(K), 1.0 / np.sqrt(K))
    # classifier: Linear(K, K) then Linear(K, L)
    w_cls0, b_cls0 = linear_default(ks[7], ks[8], K, K)
    w_cls1, b_cls1 = linear_default(ks[9], ks[10], L, K)

    # Dirichlet-prior-derived mean / logvar (alpha = 0.1 everywhere)
    alpha = np.full((1, K), 0.1)
    prior_mean = (np.log(alpha).T - np.mean(np.log(alpha), 1)).T
    prior_var = ((1.0 / alpha * (1 - 2.0 / K)).T
                 + 1.0 / (K * K) * np.sum(1.0 / alpha, 1)).T
    prior_logvar = np.log(prior_var)
    prior_inv_var = 1.0 / prior_var               # host-precomputed exp(-prior_logvar)

    # merged mean||logvar projection weights (x-part and y-part of en0)
    w_ml_x = jnp.concatenate([w_mean[:, :E].T, w_logvar[:, :E].T], axis=1)   # (E, 2K)
    w_ml_y = jnp.concatenate([w_mean[:, E:].T, w_logvar[:, E:].T], axis=1)   # (L, 2K)
    b_ml = jnp.concatenate([b_mean, b_logvar]).reshape(1, 2 * K)

    return {
        'w_emb_T': w_emb.T,                                 # (V, E)
        'w_ml_x': w_ml_x,                                   # (E, 2K)
        'w_ml_y': w_ml_y,                                   # (L, 2K)
        'b_ml': b_ml,                                       # (1, 2K)
        'bn_ml_bias': jnp.zeros((1, 2 * K), jnp.float32),   # mean-BN || logvar-BN bias
        'w_beta_T': w_beta.T,                               # (K, V)
        'b_beta': b_beta.reshape(1, V),
        'bn_eta_bias': jnp.zeros((1, V), jnp.float32),
        'w_cls0': w_cls0.T,                                 # (K, K)
        'b_cls0': b_cls0.reshape(1, K),
        'w_cls1': w_cls1.T,                                 # (K, L)
        'b_cls1': b_cls1.reshape(1, L),
        'prior_mean': jnp.asarray(prior_mean, jnp.float32),       # (1, K)
        'prior_logvar': jnp.asarray(prior_logvar, jnp.float32),   # (1, K)
        'prior_inv_var': jnp.asarray(prior_inv_var, jnp.float32), # (1, K)
    }


if __name__ == "__main__":
    key = jax.random.PRNGKey(0)
    kp, kx, ky, ke = jax.random.split(key, 4)
    params = make_params(kp)

    # X: bag-of-words counts [B, V]; Y: one-hot labels [B, L]
    X = jax.random.poisson(kx, 2.0, (B, V)).astype(jnp.float32)
    Y = jax.nn.one_hot(jax.random.randint(ky, (B,), 0, L), L, dtype=jnp.float32)
    # reparameterization noise
    noise = jax.random.normal(ke, (B, K), jnp.float32)

    fwd = jax.jit(functools.partial(scholar_forward, eta_bn_prop=1.0, var_scale=1.0))
    theta, X_recon, Y_recon, (loss, NL, KLD) = fwd(params, X, Y, noise)
    jax.block_until_ready((theta, X_recon, Y_recon, loss, NL, KLD))

    assert theta.shape == (B, K) and X_recon.shape == (B, V) and Y_recon.shape == (B, L)
    assert loss.shape == () and NL.shape == () and KLD.shape == ()
    print("KERNEL_OK")
</pallas_src>

<mosaic_0001>
module attributes {stable_mosaic.version = 11 : i64} {
  func.func @scholar_fused_kernel(%arg0: memref<8x64xf32, #tpu.memory_space<vmem>>, %arg1: memref<8x4xf32, #tpu.memory_space<vmem>>, %arg2: memref<8x16xf32, #tpu.memory_space<vmem>>, %arg3: memref<64x32xf32, #tpu.memory_space<vmem>>, %arg4: memref<32x32xf32, #tpu.memory_space<vmem>>, %arg5: memref<4x32xf32, #tpu.memory_space<vmem>>, %arg6: memref<1x32xf32, #tpu.memory_space<vmem>>, %arg7: memref<1x32xf32, #tpu.memory_space<vmem>>, %arg8: memref<16x64xf32, #tpu.memory_space<vmem>>, %arg9: memref<1x64xf32, #tpu.memory_space<vmem>>, %arg10: memref<1x64xf32, #tpu.memory_space<vmem>>, %arg11: memref<16x16xf32, #tpu.memory_space<vmem>>, %arg12: memref<1x16xf32, #tpu.memory_space<vmem>>, %arg13: memref<16x4xf32, #tpu.memory_space<vmem>>, %arg14: memref<1x4xf32, #tpu.memory_space<vmem>>, %arg15: memref<1x16xf32, #tpu.memory_space<vmem>>, %arg16: memref<1x16xf32, #tpu.memory_space<vmem>>, %arg17: memref<1x16xf32, #tpu.memory_space<vmem>>, %arg18: memref<8x16xf32, #tpu.memory_space<vmem>>, %arg19: memref<8x64xf32, #tpu.memory_space<vmem>>, %arg20: memref<8x4xf32, #tpu.memory_space<vmem>>, %arg21: memref<1x128xf32, #tpu.memory_space<vmem>>) attributes {dimension_semantics = [], scalar_prefetch = 0 : i64, scratch_operands = 0 : i64, tpu.core_type = #tpu.core_type<tc>} {
    %c0 = arith.constant 0 : index
    %c0_0 = arith.constant 0 : index
    %0 = vector.load %arg0[%c0, %c0_0] : memref<8x64xf32, #tpu.memory_space<vmem>>, vector<8x64xf32>
    %c0_1 = arith.constant 0 : index
    %c0_2 = arith.constant 0 : index
    %1 = vector.load %arg1[%c0_1, %c0_2] : memref<8x4xf32, #tpu.memory_space<vmem>>, vector<8x4xf32>
    %c0_3 = arith.constant 0 : index
    %c0_4 = arith.constant 0 : index
    %2 = vector.load %arg3[%c0_3, %c0_4] : memref<64x32xf32, #tpu.memory_space<vmem>>, vector<64x32xf32>
    %cst = arith.constant dense<0.000000e+00> : vector<8x32xf32>
    %3 = tpu.matmul %0, %2, %cst {dimension_numbers = #tpu.dot_dimension_numbers<[1], [0], [0], [1], [0, 0, 1, 1], [], []>} : vector<8x64xf32>, vector<64x32xf32>, vector<8x32xf32> -> vector<8x32xf32>
    %cst_5 = arith.constant 0.000000e+00 : f32
    %4 = vector.broadcast %cst_5 : f32 to vector<8x32xf32>
    %5 = arith.maximumf %3, %4 : vector<8x32xf32>
    %6 = vector.broadcast %cst_5 : f32 to vector<8x32xf32>
    %7 = arith.subf %3, %6 : vector<8x32xf32>
    %8 = arith.cmpf one, %7, %7 : vector<8x32xf32>
    %9 = vector.broadcast %cst_5 : f32 to vector<8x32xf32>
    %10 = arith.addf %3, %9 : vector<8x32xf32>
    %11 = math.absf %7 : vector<8x32xf32>
    %cst_6 = arith.constant 0.000000e+00 : f32
    %12 = vector.broadcast %cst_6 : f32 to vector<8x32xf32>
    %13 = arith.subf %12, %11 : vector<8x32xf32>
    %14 = math.exp %13 : vector<8x32xf32>
    %15 = math.log1p %14 : vector<8x32xf32>
    %16 = arith.addf %5, %15 : vector<8x32xf32>
    %17 = arith.select %8, %10, %16 : vector<8x32xi1>, vector<8x32xf32>
    %cst_7 = arith.constant 0.000000e+00 : f32
    %18 = vector.broadcast %cst_7 : f32 to vector<8x4xf32>
    %19 = arith.maximumf %1, %18 : vector<8x4xf32>
    %20 = vector.broadcast %cst_7 : f32 to vector<8x4xf32>
    %21 = arith.subf %1, %20 : vector<8x4xf32>
    %22 = arith.cmpf one, %21, %21 : vector<8x4xf32>
    %23 = vector.broadcast %cst_7 : f32 to vector<8x4xf32>
    %24 = arith.addf %1, %23 : vector<8x4xf32>
    %25 = math.absf %21 : vector<8x4xf32>
    %cst_8 = arith.constant 0.000000e+00 : f32
    %26 = vector.broadcast %cst_8 : f32 to vector<8x4xf32>
    %27 = arith.subf %26, %25 : vector<8x4xf32>
    %28 = math.exp %27 : vector<8x4xf32>
    %29 = math.log1p %28 : vector<8x4xf32>
    %30 = arith.addf %19, %29 : vector<8x4xf32>
    %31 = arith.select %22, %24, %30 : vector<8x4xi1>, vector<8x4xf32>
    %c0_9 = arith.constant 0 : index
    %c0_10 = arith.constant 0 : index
    %32 = vector.load %arg4[%c0_9, %c0_10] : memref<32x32xf32, #tpu.memory_space<vmem>>, vector<32x32xf32>
    %cst_11 = arith.constant dense<0.000000e+00> : vector<8x32xf32>
    %33 = tpu.matmul %17, %32, %cst_11 {dimension_numbers = #tpu.dot_dimension_numbers<[1], [0], [0], [1], [0, 0, 1, 1], [], []>} : vector<8x32xf32>, vector<32x32xf32>, vector<8x32xf32> -> vector<8x32xf32>
    %c0_12 = arith.constant 0 : index
    %c0_13 = arith.constant 0 : index
    %34 = vector.load %arg5[%c0_12, %c0_13] : memref<4x32xf32, #tpu.memory_space<vmem>>, vector<4x32xf32>
    %cst_14 = arith.constant dense<0.000000e+00> : vector<8x32xf32>
    %35 = tpu.matmul %31, %34, %cst_14 {dimension_numbers = #tpu.dot_dimension_numbers<[1], [0], [0], [1], [0, 0, 1, 1], [], []>} : vector<8x4xf32>, vector<4x32xf32>, vector<8x32xf32> -> vector<8x32xf32>
    %36 = arith.addf %33, %35 : vector<8x32xf32>
    %c0_15 = arith.constant 0 : index
    %c0_16 = arith.constant 0 : index
    %37 = vector.load %arg6[%c0_15, %c0_16] : memref<1x32xf32, #tpu.memory_space<vmem>>, vector<1x32xf32>
    %38 = vector.broadcast %37 : vector<1x32xf32> to vector<8x32xf32>
    %39 = arith.addf %36, %38 : vector<8x32xf32>
    %c0_17 = arith.constant 0 : index
    %c0_18 = arith.constant 0 : index
    %40 = vector.load %arg7[%c0_17, %c0_18] : memref<1x32xf32, #tpu.memory_space<vmem>>, vector<1x32xf32>
    %cst_19 = arith.constant dense<0.000000e+00> : vector<32xf32>
    %41 = vector.multi_reduction <add>, %39, %cst_19 [0] : vector<8x32xf32> to vector<32xf32>
    %42 = vector.shape_cast %41 : vector<32xf32> to vector<1x32xf32>
    %cst_20 = arith.constant 8.000000e+00 : f32
    %43 = vector.broadcast %cst_20 : f32 to vector<1x32xf32>
    %44 = arith.divf %42, %43 : vector<1x32xf32>
    %45 = vector.broadcast %44 : vector<1x32xf32> to vector<8x32xf32>
    %46 = arith.subf %39, %45 : vector<8x32xf32>
    %47 = arith.mulf %46, %46 : vector<8x32xf32>
    %cst_21 = arith.constant dense<0.000000e+00> : vector<32xf32>
    %48 = vector.multi_reduction <add>, %47, %cst_21 [0] : vector<8x32xf32> to vector<32xf32>
    %49 = vector.shape_cast %48 : vector<32xf32> to vector<1x32xf32>
    %cst_22 = arith.constant 8.000000e+00 : f32
    %50 = vector.broadcast %cst_22 : f32 to vector<1x32xf32>
    %51 = arith.divf %49, %50 : vector<1x32xf32>
    %52 = vector.broadcast %44 : vector<1x32xf32> to vector<8x32xf32>
    %53 = arith.subf %39, %52 : vector<8x32xf32>
    %cst_23 = arith.constant 1.000000e-03 : f32
    %54 = vector.broadcast %cst_23 : f32 to vector<1x32xf32>
    %55 = arith.addf %51, %54 : vector<1x32xf32>
    %56 = math.rsqrt %55 : vector<1x32xf32>
    %57 = vector.broadcast %56 : vector<1x32xf32> to vector<8x32xf32>
    %58 = arith.mulf %53, %57 : vector<8x32xf32>
    %59 = vector.broadcast %40 : vector<1x32xf32> to vector<8x32xf32>
    %60 = arith.addf %58, %59 : vector<8x32xf32>
    %61 = vector.extract_strided_slice %60 {offsets = [0, 0], sizes = [8, 16], strides = [1, 1]} : vector<8x32xf32> to vector<8x16xf32>
    %62 = vector.extract_strided_slice %60 {offsets = [0, 16], sizes = [8, 16], strides = [1, 1]} : vector<8x32xf32> to vector<8x16xf32>
    %63 = math.exp %62 : vector<8x16xf32>
    %c0_24 = arith.constant 0 : index
    %c0_25 = arith.constant 0 : index
    %64 = vector.load %arg2[%c0_24, %c0_25] : memref<8x16xf32, #tpu.memory_space<vmem>>, vector<8x16xf32>
    %65 = math.sqrt %63 : vector<8x16xf32>
    %66 = arith.mulf %65, %64 : vector<8x16xf32>
    %67 = arith.addf %61, %66 : vector<8x16xf32>
    %cst_26 = arith.constant dense<0xFF800000> : vector<8xf32>
    %68 = vector.multi_reduction <maximumf>, %67, %cst_26 [1] : vector<8x16xf32> to vector<8xf32>
    %69 = vector.shape_cast %68 : vector<8xf32> to vector<8x1xf32>
    %70 = vector.broadcast %69 : vector<8x1xf32> to vector<8x16xf32>
    %71 = arith.subf %67, %70 : vector<8x16xf32>
    %72 = math.exp %71 : vector<8x16xf32>
    %cst_27 = arith.constant dense<0.000000e+00> : vector<8xf32>
    %73 = vector.multi_reduction <add>, %72, %cst_27 [1] : vector<8x16xf32> to vector<8xf32>
    %74 = vector.shape_cast %73 : vector<8xf32> to vector<8x1xf32>
    %75 = vector.broadcast %74 : vector<8x1xf32> to vector<8x16xf32>
    %76 = arith.divf %72, %75 : vector<8x16xf32>
    %c0_28 = arith.constant 0 : index
    %c0_29 = arith.constant 0 : index
    %77 = vector.load %arg8[%c0_28, %c0_29] : memref<16x64xf32, #tpu.memory_space<vmem>>, vector<16x64xf32>
    %cst_30 = arith.constant dense<0.000000e+00> : vector<8x64xf32>
    %78 = tpu.matmul %76, %77, %cst_30 {dimension_numbers = #tpu.dot_dimension_numbers<[1], [0], [0], [1], [0, 0, 1, 1], [], []>} : vector<8x16xf32>, vector<16x64xf32>, vector<8x64xf32> -> vector<8x64xf32>
    %c0_31 = arith.constant 0 : index
    %c0_32 = arith.constant 0 : index
    %79 = vector.load %arg9[%c0_31, %c0_32] : memref<1x64xf32, #tpu.memory_space<vmem>>, vector<1x64xf32>
    %80 = vector.broadcast %79 : vector<1x64xf32> to vector<8x64xf32>
    %81 = arith.addf %78, %80 : vector<8x64xf32>
    %c0_33 = arith.constant 0 : index
    %c0_34 = arith.constant 0 : index
    %82 = vector.load %arg10[%c0_33, %c0_34] : memref<1x64xf32, #tpu.memory_space<vmem>>, vector<1x64xf32>
    %cst_35 = arith.constant dense<0.000000e+00> : vector<64xf32>
    %83 = vector.multi_reduction <add>, %81, %cst_35 [0] : vector<8x64xf32> to vector<64xf32>
    %84 = vector.shape_cast %83 : vector<64xf32> to vector<1x64xf32>
    %cst_36 = arith.constant 8.000000e+00 : f32
    %85 = vector.broadcast %cst_36 : f32 to vector<1x64xf32>
    %86 = arith.divf %84, %85 : vector<1x64xf32>
    %87 = vector.broadcast %86 : vector<1x64xf32> to vector<8x64xf32>
    %88 = arith.subf %81, %87 : vector<8x64xf32>
    %89 = arith.mulf %88, %88 : vector<8x64xf32>
    %cst_37 = arith.constant dense<0.000000e+00> : vector<64xf32>
    %90 = vector.multi_reduction <add>, %89, %cst_37 [0] : vector<8x64xf32> to vector<64xf32>
    %91 = vector.shape_cast %90 : vector<64xf32> to vector<1x64xf32>
    %cst_38 = arith.constant 8.000000e+00 : f32
    %92 = vector.broadcast %cst_38 : f32 to vector<1x64xf32>
    %93 = arith.divf %91, %92 : vector<1x64xf32>
    %94 = vector.broadcast %86 : vector<1x64xf32> to vector<8x64xf32>
    %95 = arith.subf %81, %94 : vector<8x64xf32>
    %cst_39 = arith.constant 1.000000e-03 : f32
    %96 = vector.broadcast %cst_39 : f32 to vector<1x64xf32>
    %97 = arith.addf %93, %96 : vector<1x64xf32>
    %98 = math.rsqrt %97 : vector<1x64xf32>
    %99 = vector.broadcast %98 : vector<1x64xf32> to vector<8x64xf32>
    %100 = arith.mulf %95, %99 : vector<8x64xf32>
    %101 = vector.broadcast %82 : vector<1x64xf32> to vector<8x64xf32>
    %102 = arith.addf %100, %101 : vector<8x64xf32>
    %cst_40 = arith.constant dense<0xFF800000> : vector<8xf32>
    %103 = vector.multi_reduction <maximumf>, %102, %cst_40 [1] : vector<8x64xf32> to vector<8xf32>
    %104 = vector.shape_cast %103 : vector<8xf32> to vector<8x1xf32>
    %105 = vector.broadcast %104 : vector<8x1xf32> to vector<8x64xf32>
    %106 = arith.subf %102, %105 : vector<8x64xf32>
    %107 = math.exp %106 : vector<8x64xf32>
    %cst_41 = arith.constant dense<0.000000e+00> : vector<8xf32>
    %108 = vector.multi_reduction <add>, %107, %cst_41 [1] : vector<8x64xf32> to vector<8xf32>
    %109 = vector.shape_cast %108 : vector<8xf32> to vector<8x1xf32>
    %110 = vector.broadcast %109 : vector<8x1xf32> to vector<8x64xf32>
    %111 = arith.divf %107, %110 : vector<8x64xf32>
    %c0_42 = arith.constant 0 : index
    %c0_43 = arith.constant 0 : index
    %112 = vector.load %arg11[%c0_42, %c0_43] : memref<16x16xf32, #tpu.memory_space<vmem>>, vector<16x16xf32>
    %cst_44 = arith.constant dense<0.000000e+00> : vector<8x16xf32>
    %113 = tpu.matmul %76, %112, %cst_44 {dimension_numbers = #tpu.dot_dimension_numbers<[1], [0], [0], [1], [0, 0, 1, 1], [], []>} : vector<8x16xf32>, vector<16x16xf32>, vector<8x16xf32> -> vector<8x16xf32>
    %c0_45 = arith.constant 0 : index
    %c0_46 = arith.constant 0 : index
    %114 = vector.load %arg12[%c0_45, %c0_46] : memref<1x16xf32, #tpu.memory_space<vmem>>, vector<1x16xf32>
    %115 = vector.broadcast %114 : vector<1x16xf32> to vector<8x16xf32>
    %116 = arith.addf %113, %115 : vector<8x16xf32>
    %cst_47 = arith.constant 0.000000e+00 : f32
    %117 = vector.broadcast %cst_47 : f32 to vector<8x16xf32>
    %118 = arith.maximumf %116, %117 : vector<8x16xf32>
    %119 = vector.broadcast %cst_47 : f32 to vector<8x16xf32>
    %120 = arith.subf %116, %119 : vector<8x16xf32>
    %121 = arith.cmpf one, %120, %120 : vector<8x16xf32>
    %122 = vector.broadcast %cst_47 : f32 to vector<8x16xf32>
    %123 = arith.addf %116, %122 : vector<8x16xf32>
    %124 = math.absf %120 : vector<8x16xf32>
    %cst_48 = arith.constant 0.000000e+00 : f32
    %125 = vector.broadcast %cst_48 : f32 to vector<8x16xf32>
    %126 = arith.subf %125, %124 : vector<8x16xf32>
    %127 = math.exp %126 : vector<8x16xf32>
    %128 = math.log1p %127 : vector<8x16xf32>
    %129 = arith.addf %118, %128 : vector<8x16xf32>
    %130 = arith.select %121, %123, %129 : vector<8x16xi1>, vector<8x16xf32>
    %c0_49 = arith.constant 0 : index
    %c0_50 = arith.constant 0 : index
    %131 = vector.load %arg13[%c0_49, %c0_50] : memref<16x4xf32, #tpu.memory_space<vmem>>, vector<16x4xf32>
    %cst_51 = arith.constant dense<0.000000e+00> : vector<8x4xf32>
    %132 = tpu.matmul %130, %131, %cst_51 {dimension_numbers = #tpu.dot_dimension_numbers<[1], [0], [0], [1], [0, 0, 1, 1], [], []>} : vector<8x16xf32>, vector<16x4xf32>, vector<8x4xf32> -> vector<8x4xf32>
    %c0_52 = arith.constant 0 : index
    %c0_53 = arith.constant 0 : index
    %133 = vector.load %arg14[%c0_52, %c0_53] : memref<1x4xf32, #tpu.memory_space<vmem>>, vector<1x4xf32>
    %134 = vector.broadcast %133 : vector<1x4xf32> to vector<8x4xf32>
    %135 = arith.addf %132, %134 : vector<8x4xf32>
    %cst_54 = arith.constant dense<0xFF800000> : vector<8xf32>
    %136 = vector.multi_reduction <maximumf>, %135, %cst_54 [1] : vector<8x4xf32> to vector<8xf32>
    %137 = vector.shape_cast %136 : vector<8xf32> to vector<8x1xf32>
    %138 = vector.broadcast %137 : vector<8x1xf32> to vector<8x4xf32>
    %139 = arith.subf %135, %138 : vector<8x4xf32>
    %140 = math.exp %139 : vector<8x4xf32>
    %cst_55 = arith.constant dense<0.000000e+00> : vector<8xf32>
    %141 = vector.multi_reduction <add>, %140, %cst_55 [1] : vector<8x4xf32> to vector<8xf32>
    %142 = vector.shape_cast %141 : vector<8xf32> to vector<8x1xf32>
    %143 = vector.broadcast %142 : vector<8x1xf32> to vector<8x4xf32>
    %144 = arith.divf %140, %143 : vector<8x4xf32>
    %cst_56 = arith.constant 1.000000e-10 : f32
    %145 = vector.broadcast %cst_56 : f32 to vector<8x64xf32>
    %146 = arith.addf %111, %145 : vector<8x64xf32>
    %147 = math.log %146 : vector<8x64xf32>
    %148 = arith.mulf %0, %147 : vector<8x64xf32>
    %cst_57 = arith.constant dense<0.000000e+00> : vector<8xf32>
    %149 = vector.multi_reduction <add>, %148, %cst_57 [1] : vector<8x64xf32> to vector<8xf32>
    %150 = vector.shape_cast %149 : vector<8xf32> to vector<8x1xf32>
    %cst_58 = arith.constant 0.000000e+00 : f32
    %151 = vector.broadcast %cst_58 : f32 to vector<8x1xf32>
    %152 = arith.subf %151, %150 : vector<8x1xf32>
    %cst_59 = arith.constant 1.000000e-10 : f32
    %153 = vector.broadcast %cst_59 : f32 to vector<8x4xf32>
    %154 = arith.addf %144, %153 : vector<8x4xf32>
    %155 = math.log %154 : vector<8x4xf32>
    %156 = arith.mulf %1, %155 : vector<8x4xf32>
    %cst_60 = arith.constant dense<0.000000e+00> : vector<8xf32>
    %157 = vector.multi_reduction <add>, %156, %cst_60 [1] : vector<8x4xf32> to vector<8xf32>
    %158 = vector.shape_cast %157 : vector<8xf32> to vector<8x1xf32>
    %159 = arith.subf %152, %158 : vector<8x1xf32>
    %c0_61 = arith.constant 0 : index
    %c0_62 = arith.constant 0 : index
    %160 = vector.load %arg17[%c0_61, %c0_62] : memref<1x16xf32, #tpu.memory_space<vmem>>, vector<1x16xf32>
    %161 = vector.broadcast %160 : vector<1x16xf32> to vector<8x16xf32>
    %162 = arith.mulf %63, %161 : vector<8x16xf32>
    %c0_63 = arith.constant 0 : index
    %c0_64 = arith.constant 0 : index
    %163 = vector.load %arg15[%c0_63, %c0_64] : memref<1x16xf32, #tpu.memory_space<vmem>>, vector<1x16xf32>
    %164 = vector.broadcast %163 : vector<1x16xf32> to vector<8x16xf32>
    %165 = arith.subf %61, %164 : vector<8x16xf32>
    %166 = arith.mulf %165, %165 : vector<8x16xf32>
    %167 = vector.broadcast %160 : vector<1x16xf32> to vector<8x16xf32>
    %168 = arith.mulf %166, %167 : vector<8x16xf32>
    %c0_65 = arith.constant 0 : index
    %c0_66 = arith.constant 0 : index
    %169 = vector.load %arg16[%c0_65, %c0_66] : memref<1x16xf32, #tpu.memory_space<vmem>>, vector<1x16xf32>
    %170 = vector.broadcast %169 : vector<1x16xf32> to vector<8x16xf32>
    %171 = arith.subf %170, %62 : vector<8x16xf32>
    %172 = arith.addf %162, %168 : vector<8x16xf32>
    %173 = arith.addf %172, %171 : vector<8x16xf32>
    %cst_67 = arith.constant dense<0.000000e+00> : vector<8xf32>
    %174 = vector.multi_reduction <add>, %173, %cst_67 [1] : vector<8x16xf32> to vector<8xf32>
    %175 = vector.shape_cast %174 : vector<8xf32> to vector<8x1xf32>
    %cst_68 = arith.constant 1.600000e+01 : f32
    %176 = vector.broadcast %cst_68 : f32 to vector<8x1xf32>
    %177 = arith.subf %175, %176 : vector<8x1xf32>
    %cst_69 = arith.constant 5.000000e-01 : f32
    %178 = vector.broadcast %cst_69 : f32 to vector<8x1xf32>
    %179 = arith.mulf %178, %177 : vector<8x1xf32>
    %180 = arith.addf %159, %179 : vector<8x1xf32>
    %181 = vector.shape_cast %180 : vector<8x1xf32> to vector<1x8x1xf32>
    %cst_70 = arith.constant dense<0.000000e+00> : vector<1xf32>
    %182 = vector.multi_reduction <add>, %181, %cst_70 [1, 2] : vector<1x8x1xf32> to vector<1xf32>
    %183 = vector.shape_cast %182 : vector<1xf32> to vector<1x1x1xf32>
    %184 = vector.extract %183[0, 0, 0] : f32 from vector<1x1x1xf32>
    %cst_71 = arith.constant 1.250000e-01 : f32
    %185 = arith.mulf %184, %cst_71 : f32
    %186 = vector.shape_cast %159 : vector<8x1xf32> to vector<1x8x1xf32>
    %cst_72 = arith.constant dense<0.000000e+00> : vector<1xf32>
    %187 = vector.multi_reduction <add>, %186, %cst_72 [1, 2] : vector<1x8x1xf32> to vector<1xf32>
    %188 = vector.shape_cast %187 : vector<1xf32> to vector<1x1x1xf32>
    %189 = vector.extract %188[0, 0, 0] : f32 from vector<1x1x1xf32>
    %cst_73 = arith.constant 1.250000e-01 : f32
    %190 = arith.mulf %189, %cst_73 : f32
    %191 = vector.shape_cast %179 : vector<8x1xf32> to vector<1x8x1xf32>
    %cst_74 = arith.constant dense<0.000000e+00> : vector<1xf32>
    %192 = vector.multi_reduction <add>, %191, %cst_74 [1, 2] : vector<1x8x1xf32> to vector<1xf32>
    %193 = vector.shape_cast %192 : vector<1xf32> to vector<1x1x1xf32>
    %194 = vector.extract %193[0, 0, 0] : f32 from vector<1x1x1xf32>
    %cst_75 = arith.constant 1.250000e-01 : f32
    %195 = arith.mulf %194, %cst_75 : f32
    %c0_76 = arith.constant 0 : index
    %c0_77 = arith.constant 0 : index
    %196 = vector.load %arg18[%c0_76, %c0_77] : memref<8x16xf32, #tpu.memory_space<vmem>>, vector<8x16xf32>
    tpu.vector_store %arg18[%c0_76, %c0_77], %76 {strides = array<i32>} : memref<8x16xf32, #tpu.memory_space<vmem>>, vector<8x16xf32>,
    %c0_78 = arith.constant 0 : index
    %c0_79 = arith.constant 0 : index
    %197 = vector.load %arg19[%c0_78, %c0_79] : memref<8x64xf32, #tpu.memory_space<vmem>>, vector<8x64xf32>
    tpu.vector_store %arg19[%c0_78, %c0_79], %111 {strides = array<i32>} : memref<8x64xf32, #tpu.memory_space<vmem>>, vector<8x64xf32>,
    %c0_80 = arith.constant 0 : index
    %c0_81 = arith.constant 0 : index
    %198 = vector.load %arg20[%c0_80, %c0_81] : memref<8x4xf32, #tpu.memory_space<vmem>>, vector<8x4xf32>
    tpu.vector_store %arg20[%c0_80, %c0_81], %144 {strides = array<i32>} : memref<8x4xf32, #tpu.memory_space<vmem>>, vector<8x4xf32>,
    %199 = tpu.iota {dimensions = array<i32: 1>} : vector<1x128xi32>
    %c0_i32 = arith.constant 0 : i32
    %200 = vector.broadcast %c0_i32 : i32 to vector<1x128xi32>
    %201 = arith.cmpi eq, %199, %200 : vector<1x128xi32>
    %c1_i32 = arith.constant 1 : i32
    %202 = vector.broadcast %c1_i32 : i32 to vector<1x128xi32>
    %203 = arith.cmpi eq, %199, %202 : vector<1x128xi32>
    %c2_i32 = arith.constant 2 : i32
    %204 = vector.broadcast %c2_i32 : i32 to vector<1x128xi32>
    %205 = arith.cmpi eq, %199, %204 : vector<1x128xi32>
    %cst_82 = arith.constant 0.000000e+00 : f32
    %206 = vector.broadcast %195 : f32 to vector<1x128xf32>
    %207 = vector.broadcast %cst_82 : f32 to vector<1x128xf32>
    %208 = arith.select %205, %206, %207 : vector<1x128xi1>, vector<1x128xf32>
    %209 = vector.broadcast %190 : f32 to vector<1x128xf32>
    %210 = arith.select %203, %209, %208 : vector<1x128xi1>, vector<1x128xf32>
    %211 = vector.broadcast %185 : f32 to vector<1x128xf32>
    %212 = arith.select %201, %211, %210 : vector<1x128xi1>, vector<1x128xf32>
    %c0_83 = arith.constant 0 : index
    %c0_84 = arith.constant 0 : index
    %213 = vector.load %arg21[%c0_83, %c0_84] : memref<1x128xf32, #tpu.memory_space<vmem>>, vector<1x128xf32>
    tpu.vector_store %arg21[%c0_83, %c0_84], %212 {strides = array<i32>} : memref<1x128xf32, #tpu.memory_space<vmem>>, vector<1x128xf32>,
    return
  }
}

</mosaic_0001>

<llo_original>
// kernel: scholar_forward.1
$region0: #{scholar_forward.1}
  #allocation0 [shape = 'u32[]', space=smem, size = 0x4, offset = 0x4, fixed_abs, tag = 'smem constant byte address 0x4 - core index']
  #allocation1 [shape = 'u32[144,128]{1,0:T(1,128)}', space=vmem, size = 0x12000, scoped, tag = 'internal scratch']
  %s0 = inlined_call_operand.vmem [shape: f32[8,64], index: 0, kind: input, shape index: {}]
  %s1 = inlined_call_operand.vmem [shape: f32[8,4], index: 1, kind: input, shape index: {}]
  %s2 = inlined_call_operand.vmem [shape: f32[8,16], index: 2, kind: input, shape index: {}]
  %s3 = inlined_call_operand.vmem [shape: f32[64,32], index: 3, kind: input, shape index: {}]
  %s4 = inlined_call_operand.vmem [shape: f32[32,32], index: 4, kind: input, shape index: {}]
  %s5 = inlined_call_operand.vmem [shape: f32[4,32], index: 5, kind: input, shape index: {}]
  %s6 = inlined_call_operand.vmem [shape: f32[1,32], index: 6, kind: input, shape index: {}]
  %s7 = inlined_call_operand.vmem [shape: f32[1,32], index: 7, kind: input, shape index: {}]
  %s8 = inlined_call_operand.vmem [shape: f32[16,64], index: 8, kind: input, shape index: {}]
  %s9 = inlined_call_operand.vmem [shape: f32[1,64], index: 9, kind: input, shape index: {}]
  %s10 = inlined_call_operand.vmem [shape: f32[1,64], index: 10, kind: input, shape index: {}]
  %s11 = inlined_call_operand.vmem [shape: f32[16,16], index: 11, kind: input, shape index: {}]
  %s12 = inlined_call_operand.vmem [shape: f32[1,16], index: 12, kind: input, shape index: {}]
  %s13 = inlined_call_operand.vmem [shape: f32[16,4], index: 13, kind: input, shape index: {}]
  %s14 = inlined_call_operand.vmem [shape: f32[1,4], index: 14, kind: input, shape index: {}]
  %s15 = inlined_call_operand.vmem [shape: f32[1,16], index: 15, kind: input, shape index: {}]
  %s16 = inlined_call_operand.vmem [shape: f32[1,16], index: 16, kind: input, shape index: {}]
  %s17 = inlined_call_operand.vmem [shape: f32[1,16], index: 17, kind: input, shape index: {}]
  %s18 = inlined_call_operand.hbm [shape: f32[8,16], index: 18, kind: output, shape index: {0}]
  %s19 = inlined_call_operand.hbm [shape: f32[8,64], index: 19, kind: output, shape index: {1}]
  %s20 = inlined_call_operand.vmem [shape: f32[8,4], index: 20, kind: output, shape index: {2}]
  %s21 = inlined_call_operand.vmem [shape: f32[1,128], index: 21, kind: output, shape index: {3}]
  %22 = xla_tuple %s18, %s19, %s20, %s21
  %s23 = sld [smem:[#allocation0]]
  $region106: #{scholar_forward.1} parent=0
    _
  %s25 = ssub.s32 1, %s23
  %s26 = scalar_select 0, %s25, %s23
  $region1: #{scholar_forward.1} parent=0
    #allocation2 [shape = 'u8[4096]{0}', space=vmem, size = 0x1000, scoped, tag = 'output window, operand 0, single buffered']
    #allocation3 [shape = 's32[1]{0}', space=sflag, size = 0x4, scoped, tag = 'scoped memory for scholar_forward.1']
    #allocation4 [shape = 'u8[4096]{0}', space=vmem, size = 0x1000, scoped, tag = 'output window, operand 1, single buffered']
    #allocation5 [shape = 's32[1]{0}', space=sflag, size = 0x4, scoped, tag = 'scoped memory for scholar_forward.1']
    %27 = vsyncpa [#allocation3], 0
    %28 = vsyncpa [#allocation5], 0
    // Predicated region
    $region2: #{scholar_forward.1} parent=1 // pred_check
      _
    $region3: #{scholar_forward.1} parent=1 // pred_check_branch
      %30 = sbr.rel (0) target = $region5
    $region4: #{scholar_forward.1} parent=1 // pred_region
      _
    $region5: #{scholar_forward.1} parent=1 // pred_fallthru
      _
    // Predicated region
    $region6: #{scholar_forward.1} parent=1 // pred_check
      _
    $region7: #{scholar_forward.1} parent=1 // pred_check_branch
      %32 = sbr.rel (0) target = $region9
    $region8: #{scholar_forward.1} parent=1 // pred_region
      _
    $region9: #{scholar_forward.1} parent=1 // pred_fallthru
      _
    // Predicated region
    $region10: #{scholar_forward.1} parent=1 // pred_check
      _
    $region11: #{scholar_forward.1} parent=1 // pred_check_branch
      %34 = sbr.rel (0) target = $region13
    $region12: #{scholar_forward.1} parent=1 // pred_region
      _
    $region13: #{scholar_forward.1} parent=1 // pred_fallthru
      _
    // Predicated region
    $region14: #{scholar_forward.1} parent=1 // pred_check
      _
    $region15: #{scholar_forward.1} parent=1 // pred_check_branch
      %36 = sbr.rel (0) target = $region17
    $region16: #{scholar_forward.1} parent=1 // pred_region
      _
    $region17: #{scholar_forward.1} parent=1 // pred_fallthru
      _
    // Predicated region
    $region18: #{scholar_forward.1} parent=1 // pred_check
      _
    $region19: #{scholar_forward.1} parent=1 // pred_check_branch
      %38 = sbr.rel (0) target = $region21
    $region20: #{scholar_forward.1} parent=1 // pred_region
      _
    $region21: #{scholar_forward.1} parent=1 // pred_fallthru
      _
    // Predicated region
    $region22: #{scholar_forward.1} parent=1 // pred_check
      _
    $region23: #{scholar_forward.1} parent=1 // pred_check_branch
      %40 = sbr.rel (0) target = $region25
    $region24: #{scholar_forward.1} parent=1 // pred_region
      _
    $region25: #{scholar_forward.1} parent=1 // pred_fallthru
      _
    // Predicated region
    $region26: #{scholar_forward.1} parent=1 // pred_check
      _
    $region27: #{scholar_forward.1} parent=1 // pred_check_branch
      %42 = sbr.rel (0) target = $region29
    $region28: #{scholar_forward.1} parent=1 // pred_region
      _
    $region29: #{scholar_forward.1} parent=1 // pred_fallthru
      _
    // Predicated region
    $region30: #{scholar_forward.1} parent=1 // pred_check
      _
    $region31: #{scholar_forward.1} parent=1 // pred_check_branch
      %44 = sbr.rel (0) target = $region33
    $region32: #{scholar_forward.1} parent=1 // pred_region
      _
    $region33: #{scholar_forward.1} parent=1 // pred_fallthru
      _
    // Predicated region
    $region34: #{scholar_forward.1} parent=1 // pred_check
      _
    $region35: #{scholar_forward.1} parent=1 // pred_check_branch
      %46 = sbr.rel (0) target = $region37
    $region36: #{scholar_forward.1} parent=1 // pred_region
      _
    $region37: #{scholar_forward.1} parent=1 // pred_fallthru
      _
    // Predicated region
    $region38: #{scholar_forward.1} parent=1 // pred_check
      _
    $region39: #{scholar_forward.1} parent=1 // pred_check_branch
      %48 = sbr.rel (0) target = $region41
    $region40: #{scholar_forward.1} parent=1 // pred_region
      _
    $region41: #{scholar_forward.1} parent=1 // pred_fallthru
      _
    // Predicated region
    $region42: #{scholar_forward.1} parent=1 // pred_check
      _
    $region43: #{scholar_forward.1} parent=1 // pred_check_branch
      %50 = sbr.rel (0) target = $region45
    $region44: #{scholar_forward.1} parent=1 // pred_region
      _
    $region45: #{scholar_forward.1} parent=1 // pred_fallthru
      _
    // Predicated region
    $region46: #{scholar_forward.1} parent=1 // pred_check
      _
    $region47: #{scholar_forward.1} parent=1 // pred_check_branch
      %52 = sbr.rel (0) target = $region49
    $region48: #{scholar_forward.1} parent=1 // pred_region
      _
    $region49: #{scholar_forward.1} parent=1 // pred_fallthru
      _
    // Predicated region
    $region50: #{scholar_forward.1} parent=1 // pred_check
      _
    $region51: #{scholar_forward.1} parent=1 // pred_check_branch
      %54 = sbr.rel (0) target = $region53
    $region52: #{scholar_forward.1} parent=1 // pred_region
      _
    $region53: #{scholar_forward.1} parent=1 // pred_fallthru
      _
    // Predicated region
    $region54: #{scholar_forward.1} parent=1 // pred_check
      _
    $region55: #{scholar_forward.1} parent=1 // pred_check_branch
      %56 = sbr.rel (0) target = $region57
    $region56: #{scholar_forward.1} parent=1 // pred_region
      _
    $region57: #{scholar_forward.1} parent=1 // pred_fallthru
      _
    // Predicated region
    $region58: #{scholar_forward.1} parent=1 // pred_check
      _
    $region59: #{scholar_forward.1} parent=1 // pred_check_branch
      %58 = sbr.rel (0) target = $region61
    $region60: #{scholar_forward.1} parent=1 // pred_region
      _
    $region61: #{scholar_forward.1} parent=1 // pred_fallthru
      _
    // Predicated region
    $region62: #{scholar_forward.1} parent=1 // pred_check
      _
    $region63: #{scholar_forward.1} parent=1 // pred_check_branch
      %60 = sbr.rel (0) target = $region65
    $region64: #{scholar_forward.1} parent=1 // pred_region
      _
    $region65: #{scholar_forward.1} parent=1 // pred_fallthru
      _
    // Predicated region
    $region66: #{scholar_forward.1} parent=1 // pred_check
      _
    $region67: #{scholar_forward.1} parent=1 // pred_check_branch
      %62 = sbr.rel (0) target = $region69
    $region68: #{scholar_forward.1} parent=1 // pred_region
      _
    $region69: #{scholar_forward.1} parent=1 // pred_fallthru
      _
    // Predicated region
    $region70: #{scholar_forward.1} parent=1 // pred_check
      _
    $region71: #{scholar_forward.1} parent=1 // pred_check_branch
      %64 = sbr.rel (0) target = $region73
    $region72: #{scholar_forward.1} parent=1 // pred_region
      _
    $region73: #{scholar_forward.1} parent=1 // pred_fallthru
      _
    %v65 = vld [vmem:[%s0] sm:$0xff]
    %v66 = vld [vmem:[%s1] sm:$0xff]
    %v67 = vld [vmem:[%s3] sm:$0xff]
    %v68 = vld [vmem:[%s3 + $0x8] sm:$0xff]
    %v69 = vld [vmem:[%s3 + $0x10] sm:$0xff]
    %v70 = vld [vmem:[%s3 + $0x18] sm:$0xff]
    %v71 = vld [vmem:[%s3 + $0x20] sm:$0xff]
    %v72 = vld [vmem:[%s3 + $0x28] sm:$0xff]
    %v73 = vld [vmem:[%s3 + $0x30] sm:$0xff]
    %v74 = vld [vmem:[%s3 + $0x38] sm:$0xff]
    %vm75 = vcmask 523264
    %v77 = vsel %vm75, %v65, 0
    %79 = vmatprep.subr.mxu0 0.0
    %80 = vmatpush1.msra.mxu0 %v67
    %81 = vmatprep.subr.mxu0 0.0
    %82 = vmatpush1.msra.mxu0 %v68
    %83 = vmatprep.subr.mxu0 0.0
    %84 = vmatpush1.msra.mxu0 %v69
    %85 = vmatprep.subr.mxu0 0.0
    %86 = vmatpush1.msra.mxu0 %v70
    %87 = vmatprep.subr.mxu0 0.0
    %88 = vmatpush1.msra.mxu0 %v71
    %89 = vmatprep.subr.mxu0 0.0
    %90 = vmatpush1.msra.mxu0 %v72
    %91 = vmatprep.subr.mxu0 0.0
    %92 = vmatpush1.msra.mxu0 %v73
    %93 = vmatprep.subr.mxu0 0.0
    %94 = vmatpush1.msra.mxu0 %v74
    %95 = vmatprep.subr.mxu0 0.0
    %96 = vmatpush1.msra.mxu0 0.0
    %97 = vmatprep.subr.mxu0 0.0
    %98 = vmatpush1.msra.mxu0 0.0
    %99 = vmatprep.subr.mxu0 0.0
    %100 = vmatpush1.msra.mxu0 0.0
    %101 = vmatprep.subr.mxu0 0.0
    %102 = vmatpush1.msra.mxu0 0.0
    %103 = vmatprep.subr.mxu0 0.0
    %104 = vmatpush1.msra.mxu0 0.0
    %105 = vmatprep.subr.mxu0 0.0
    %106 = vmatpush1.msra.mxu0 0.0
    %107 = vmatprep.subr.mxu0 0.0
    %108 = vmatpush1.msra.mxu0 0.0
    %109 = vmatprep.subr.mxu0 0.0
    %110 = vmatpush1.msra.mxu0 0.0
    %111 = vmatprep.subr.mxu0 0.0
    %112 = vmatpush1.msra.mxu0 0.0
    %113 = vmatprep.subr.mxu0 0.0
    %114 = vmatpush1.msra.mxu0 0.0
    %115 = vmatprep.subr.mxu0 0.0
    %116 = vmatpush1.msra.mxu0 0.0
    %117 = vmatprep.subr.mxu0 0.0
    %118 = vmatpush1.msra.mxu0 0.0
    %119 = vmatprep.subr.mxu0 0.0
    %120 = vmatpush1.msra.mxu0 0.0
    %121 = vmatprep.subr.mxu0 0.0
    %122 = vmatpush1.msra.mxu0 0.0
    %123 = vmatprep.subr.mxu0 0.0
    %124 = vmatpush1.msra.mxu0 0.0
    %125 = vmatprep.subr.mxu0 0.0
    %126 = vmatpush1.msra.mxu0 0.0
    %127 = vmatprep.subr.mxu0 0.0
    %128 = vmatpush1.msra.mxu0 0.0
    %129 = vmatprep.subr.mxu0 0.0
    %130 = vmatpush1.msra.mxu0 0.0
    %131 = vmatprep.subr.mxu0 0.0
    %132 = vmatpush1.msra.mxu0 0.0
    %133 = vmatprep.subr.mxu0 0.0
    %134 = vmatpush1.msra.mxu0 0.0
    %135 = vmatprep.subr.mxu0 0.0
    %136 = vmatpush1.msra.mxu0 0.0
    %137 = vmatprep.subr.mxu0 0.0
    %138 = vmatpush1.msra.mxu0 0.0
    %139 = vmatprep.subr.mxu0 0.0
    %140 = vmatpush1.msra.mxu0 0.0
    %141 = vmatprep.subr.mxu0 0.0
    %142 = vmatpush1.msra.mxu0 0.0
    %143 = vmatprep.mubr.f32.mxu0 0.0
    %144 = vmatmul.mubr.f32.gmra.mrb[0].mxu0 %v77
    %v145 = vpop.f32.mrb[0].mxu0
    %v146 = vadd.f32 0.0, %v145
    %v147 = vpop.f32.mrb[0].mxu0
    %148 = vdwg.mxu0
    %v149 = vmax.f32 %v146, 0.0
    %vm150 = vcmp.ne.f32.partialorder %v146, %v146
    %v151 = vadd.f32 %v146, 0.0
    %v152 = vand.u32 2147483647, %v146
    %v153 = vsub.f32 0.0, %v152
    %v154 = vmul.f32 %v153, 1.442695
    %v155 = vpow.pop %v154
    %v156 = vadd.f32 %v155, 1.0
    %v157 = vlog2.pop %v156
    %v158 = vmul.f32 %v157, 0.6931472
    %v159 = vmul.f32 -0.5, %v155
    %v160 = vadd.f32 %v159, 1.0
    %v161 = vmul.f32 %v160, %v155
    %v162 = vand.u32 2147483647, %v155
    %vm163 = vcmp.lt.f32.partialorder %v162, 0.0004427343
    %v164 = vsel %vm163, %v161, %v158
    %v165 = vadd.f32 %v149, %v164
    %v166 = vsel %vm150, %v151, %v165
    %v167 = vmax.f32 %v66, 0.0
    %vm168 = vcmp.ne.f32.partialorder %v66, %v66
    %v169 = vadd.f32 %v66, 0.0
    %v170 = vand.u32 2147483647, %v66
    %v171 = vsub.f32 0.0, %v170
    %v172 = vmul.f32 %v171, 1.442695
    %v173 = vpow.pop %v172
    %v174 = vadd.f32 %v173, 1.0
    %v175 = vlog2.pop %v174
    %v176 = vmul.f32 %v175, 0.6931472
    %v177 = vmul.f32 -0.5, %v173
    %v178 = vadd.f32 %v177, 1.0
    %v179 = vmul.f32 %v178, %v173
    %v180 = vand.u32 2147483647, %v173
    %vm181 = vcmp.lt.f32.partialorder %v180, 0.0004427343
    %v182 = vsel %vm181, %v179, %v176
    %v183 = vadd.f32 %v167, %v182
    %v184 = vsel %vm168, %v169, %v183
    %v185 = vld [vmem:[%s4] sm:$0xff]
    %v186 = vld [vmem:[%s4 + $0x8] sm:$0xff]
    %v187 = vld [vmem:[%s4 + $0x10] sm:$0xff]
    %v188 = vld [vmem:[%s4 + $0x18] sm:$0xff]
    %v189 = vld [vmem:[%s5] sm:$0xf]
    %vm190 = vcmask 31744
    %v192 = vsel %vm190, %v184, 0
    %vm194 = vcmask 1043456
    %v196 = vsel %vm194, %v189, 0
    %198 = vmatprep.subr.mxu0 0.0
    %199 = vmatpush1.msra.mxu0 %v196
    %200 = vmatprep.subr.mxu0 0.0
    %201 = vmatpush1.msra.mxu0 0.0
    %202 = vmatprep.subr.mxu0 0.0
    %203 = vmatpush1.msra.mxu0 0.0
    %204 = vmatprep.subr.mxu0 0.0
    %205 = vmatpush1.msra.mxu0 0.0
    %206 = vmatprep.subr.mxu0 0.0
    %207 = vmatpush1.msra.mxu0 0.0
    %208 = vmatprep.subr.mxu0 0.0
    %209 = vmatpush1.msra.mxu0 0.0
    %210 = vmatprep.subr.mxu0 0.0
    %211 = vmatpush1.msra.mxu0 0.0
    %212 = vmatprep.subr.mxu0 0.0
    %213 = vmatpush1.msra.mxu0 0.0
    %214 = vmatprep.subr.mxu0 0.0
    %215 = vmatpush1.msra.mxu0 0.0
    %216 = vmatprep.subr.mxu0 0.0
    %217 = vmatpush1.msra.mxu0 0.0
    %218 = vmatprep.subr.mxu0 0.0
    %219 = vmatpush1.msra.mxu0 0.0
    %220 = vmatprep.subr.mxu0 0.0
    %221 = vmatpush1.msra.mxu0 0.0
    %222 = vmatprep.subr.mxu0 0.0
    %223 = vmatpush1.msra.mxu0 0.0
    %224 = vmatprep.subr.mxu0 0.0
    %225 = vmatpush1.msra.mxu0 0.0
    %226 = vmatprep.subr.mxu0 0.0
    %227 = vmatpush1.msra.mxu0 0.0
    %228 = vmatprep.subr.mxu0 0.0
    %229 = vmatpush1.msra.mxu0 0.0
    %230 = vmatprep.subr.mxu0 0.0
    %231 = vmatpush1.msra.mxu0 0.0
    %232 = vmatprep.subr.mxu0 0.0
    %233 = vmatpush1.msra.mxu0 0.0
    %234 = vmatprep.subr.mxu0 0.0
    %235 = vmatpush1.msra.mxu0 0.0
    %236 = vmatprep.subr.mxu0 0.0
    %237 = vmatpush1.msra.mxu0 0.0
    %238 = vmatprep.subr.mxu0 0.0
    %239 = vmatpush1.msra.mxu0 0.0
    %240 = vmatprep.subr.mxu0 0.0
    %241 = vmatpush1.msra.mxu0 0.0
    %242 = vmatprep.subr.mxu0 0.0
    %243 = vmatpush1.msra.mxu0 0.0
    %244 = vmatprep.subr.mxu0 0.0
    %245 = vmatpush1.msra.mxu0 0.0
    %246 = vmatprep.subr.mxu0 0.0
    %247 = vmatpush1.msra.mxu0 0.0
    %248 = vmatprep.subr.mxu0 0.0
    %249 = vmatpush1.msra.mxu0 0.0
    %250 = vmatprep.subr.mxu0 0.0
    %251 = vmatpush1.msra.mxu0 0.0
    %252 = vmatprep.subr.mxu0 0.0
    %253 = vmatpush1.msra.mxu0 0.0
    %254 = vmatprep.subr.mxu0 0.0
    %255 = vmatpush1.msra.mxu0 0.0
    %256 = vmatprep.subr.mxu0 0.0
    %257 = vmatpush1.msra.mxu0 0.0
    %258 = vmatprep.subr.mxu0 0.0
    %259 = vmatpush1.msra.mxu0 0.0
    %260 = vmatprep.subr.mxu0 0.0
    %261 = vmatpush1.msra.mxu0 0.0
    %262 = vmatprep.mubr.f32.mxu0 0.0
    %263 = vmatmul.mubr.f32.gmra.mrb[0].mxu0 %v192
    %v264 = vpop.f32.mrb[0].mxu0
    %v265 = vadd.f32 0.0, %v264
    %v266 = vpop.f32.mrb[0].mxu0
    %267 = vdwg.mxu0
    %vm268 = vcmask 261120
    %v270 = vsel %vm268, %v166, 0
    %272 = vmatprep.subr.mxu0 0.0
    %273 = vmatpush1.msra.mxu0 %v185
    %274 = vmatprep.subr.mxu0 0.0
    %275 = vmatpush1.msra.mxu0 %v186
    %276 = vmatprep.subr.mxu0 0.0
    %277 = vmatpush1.msra.mxu0 %v187
    %278 = vmatprep.subr.mxu0 0.0
    %279 = vmatpush1.msra.mxu0 %v188
    %280 = vmatprep.subr.mxu0 0.0
    %281 = vmatpush1.msra.mxu0 0.0
    %282 = vmatprep.subr.mxu0 0.0
    %283 = vmatpush1.msra.mxu0 0.0
    %284 = vmatprep.subr.mxu0 0.0
    %285 = vmatpush1.msra.mxu0 0.0
    %286 = vmatprep.subr.mxu0 0.0
    %287 = vmatpush1.msra.mxu0 0.0
    %288 = vmatprep.subr.mxu0 0.0
    %289 = vmatpush1.msra.mxu0 0.0
    %290 = vmatprep.subr.mxu0 0.0
    %291 = vmatpush1.msra.mxu0 0.0
    %292 = vmatprep.subr.mxu0 0.0
    %293 = vmatpush1.msra.mxu0 0.0
    %294 = vmatprep.subr.mxu0 0.0
    %295 = vmatpush1.msra.mxu0 0.0
    %296 = vmatprep.subr.mxu0 0.0
    %297 = vmatpush1.msra.mxu0 0.0
    %298 = vmatprep.subr.mxu0 0.0
    %299 = vmatpush1.msra.mxu0 0.0
    %300 = vmatprep.subr.mxu0 0.0
    %301 = vmatpush1.msra.mxu0 0.0
    %302 = vmatprep.subr.mxu0 0.0
    %303 = vmatpush1.msra.mxu0 0.0
    %304 = vmatprep.subr.mxu0 0.0
    %305 = vmatpush1.msra.mxu0 0.0
    %306 = vmatprep.subr.mxu0 0.0
    %307 = vmatpush1.msra.mxu0 0.0
    %308 = vmatprep.subr.mxu0 0.0
    %309 = vmatpush1.msra.mxu0 0.0
    %310 = vmatprep.subr.mxu0 0.0
    %311 = vmatpush1.msra.mxu0 0.0
    %312 = vmatprep.subr.mxu0 0.0
    %313 = vmatpush1.msra.mxu0 0.0
    %314 = vmatprep.subr.mxu0 0.0
    %315 = vmatpush1.msra.mxu0 0.0
    %316 = vmatprep.subr.mxu0 0.0
    %317 = vmatpush1.msra.mxu0 0.0
    %318 = vmatprep.subr.mxu0 0.0
    %319 = vmatpush1.msra.mxu0 0.0
    %320 = vmatprep.subr.mxu0 0.0
    %321 = vmatpush1.msra.mxu0 0.0
    %322 = vmatprep.subr.mxu0 0.0
    %323 = vmatpush1.msra.mxu0 0.0
    %324 = vmatprep.subr.mxu0 0.0
    %325 = vmatpush1.msra.mxu0 0.0
    %326 = vmatprep.subr.mxu0 0.0
    %327 = vmatpush1.msra.mxu0 0.0
    %328 = vmatprep.subr.mxu0 0.0
    %329 = vmatpush1.msra.mxu0 0.0
    %330 = vmatprep.subr.mxu0 0.0
    %331 = vmatpush1.msra.mxu0 0.0
    %332 = vmatprep.subr.mxu0 0.0
    %333 = vmatpush1.msra.mxu0 0.0
    %334 = vmatprep.subr.mxu0 0.0
    %335 = vmatpush1.msra.mxu0 0.0
    %336 = vmatprep.mubr.f32.mxu0 0.0
    %337 = vmatmul.mubr.f32.gmra.mrb[0].mxu0 %v270
    %v338 = vpop.f32.mrb[0].mxu0
    %v339 = vadd.f32 %v265, %v338
    %v340 = vpop.f32.mrb[0].mxu0
    %341 = vdwg.mxu0
    %v342 = vld [vmem:[%s6] sm:$0x1]
    %v344 = vlaneseq
    %v345 = vshrl.u32 %v344, 7
    %v346 = vsub.s32 0, %v345
    %v347 = vrot.slane %v342, %v346
    %v349 = vadd.f32 %v339, %v347
    %v350 = vld [vmem:[%s7] sm:$0x1]
    %v351 = vsel %vm268, %v349, 0.0
    %v352 = vrot.slane %v351, 4
    %v353 = vadd.f32 %v351, %v352
    %v354 = vrot.slane %v353, 2
    %v355 = vadd.f32 %v353, %v354
    %v356 = vrot.slane %v355, 1
    %v357 = vadd.f32 %v355, %v356
    %v358 = vrcp.pop 8.0
    %v359 = vmul.f32 %v357, %v358
    %v360 = vsub.f32 %v349, %v359
    %v361 = vmul.f32 %v360, %v360
    %v362 = vsel %vm268, %v361, 0.0
    %v363 = vrot.slane %v362, 4
    %v364 = vadd.f32 %v362, %v363
    %v365 = vrot.slane %v364, 2
    %v366 = vadd.f32 %v364, %v365
    %v367 = vrot.slane %v366, 1
    %v368 = vadd.f32 %v366, %v367
    %v369 = vmul.f32 %v368, %v358
    %v370 = vadd.f32 %v369, 0.001
    %v371 = vrsqrt.pop %v370
    %v372 = vmul.f32 %v360, %v371
    %v374 = vlaneseq
    %v375 = vshrl.u32 %v374, 7
    %v376 = vsub.s32 0, %v375
    %v377 = vrot.slane %v350, %v376
    %v379 = vadd.f32 %v372, %v377
    %v380 = vmul.f32 %v379, 1.442695
    %v381 = vpow.pop %v380
    %v382 = vld [vmem:[%s2] sm:$0xff]
    %v383 = vrsqrt.pop %v381
    %v384 = vmul.f32 %v381, %v383
    %vm385 = vcmp.eq.f32.partialorder %v381, inf
    %v386 = vsel %vm385, %v381, %v384
    %vm387 = vcmp.eq.f32.partialorder %v381, 0.0
    %v388 = vand.u32 %v381, 2147483648
    %v389 = vsel %vm387, %v388, %v386
    %391 = vrot.lane.b32.xlu0 %v382, 16
    %v392 = vpop.permute.xlu0 %391
    %v394 = vmul.f32 %v389, %v392
    %396 = vrot.lane.b32.xlu0 %v394, 112
    %v397 = vpop.permute.xlu0 %396
    %v399 = vadd.f32 %v379, %v397
    %vm400 = vcmask 130048
    %v401 = vsel %vm400, %v399, -inf
    %402 = vmax.xlane.f32.xlu0 %v401
    %v403 = vpop.xlane.xlu0 %402
    %v404 = vsub.f32 %v399, %v403
    %v405 = vmul.f32 %v404, 1.442695
    %v406 = vpow.pop %v405
    %v407 = vsel %vm400, %v406, 0.0
    %408 = vadd.xlane.f32.xlu0 %v407
    %v409 = vpop.xlane.xlu0 %408
    %v410 = vrcp.pop %v409
    %v411 = vmul.f32 %v406, %v410
    %v412 = vld [vmem:[%s8] sm:$0xff]
    %v413 = vld [vmem:[%s8 + $0x8] sm:$0xff]
    %v414 = vld [vmem:[%s9] sm:$0x1]
    %v416 = vlaneseq
    %v417 = vshrl.u32 %v416, 7
    %v418 = vsub.s32 0, %v417
    %v419 = vrot.slane %v414, %v418
    %v422 = vsel %vm400, %v411, 0
    %424 = vmatprep.subr.mxu0 0.0
    %425 = vmatpush1.msra.mxu0 %v412
    %426 = vmatprep.subr.mxu0 0.0
    %427 = vmatpush1.msra.mxu0 %v413
    %428 = vmatprep.subr.mxu0 0.0
    %429 = vmatpush1.msra.mxu0 0.0
    %430 = vmatprep.subr.mxu0 0.0
    %431 = vmatpush1.msra.mxu0 0.0
    %432 = vmatprep.subr.mxu0 0.0
    %433 = vmatpush1.msra.mxu0 0.0
    %434 = vmatprep.subr.mxu0 0.0
    %435 = vmatpush1.msra.mxu0 0.0
    %436 = vmatprep.subr.mxu0 0.0
    %437 = vmatpush1.msra.mxu0 0.0
    %438 = vmatprep.subr.mxu0 0.0
    %439 = vmatpush1.msra.mxu0 0.0
    %440 = vmatprep.subr.mxu0 0.0
    %441 = vmatpush1.msra.mxu0 0.0
    %442 = vmatprep.subr.mxu0 0.0
    %443 = vmatpush1.msra.mxu0 0.0
    %444 = vmatprep.subr.mxu0 0.0
    %445 = vmatpush1.msra.mxu0 0.0
    %446 = vmatprep.subr.mxu0 0.0
    %447 = vmatpush1.msra.mxu0 0.0
    %448 = vmatprep.subr.mxu0 0.0
    %449 = vmatpush1.msra.mxu0 0.0
    %450 = vmatprep.subr.mxu0 0.0
    %451 = vmatpush1.msra.mxu0 0.0
    %452 = vmatprep.subr.mxu0 0.0
    %453 = vmatpush1.msra.mxu0 0.0
    %454 = vmatprep.subr.mxu0 0.0
    %455 = vmatpush1.msra.mxu0 0.0
    %456 = vmatprep.subr.mxu0 0.0
    %457 = vmatpush1.msra.mxu0 0.0
    %458 = vmatprep.subr.mxu0 0.0
    %459 = vmatpush1.msra.mxu0 0.0
    %460 = vmatprep.subr.mxu0 0.0
    %461 = vmatpush1.msra.mxu0 0.0
    %462 = vmatprep.subr.mxu0 0.0
    %463 = vmatpush1.msra.mxu0 0.0
    %464 = vmatprep.subr.mxu0 0.0
    %465 = vmatpush1.msra.mxu0 0.0
    %466 = vmatprep.subr.mxu0 0.0
    %467 = vmatpush1.msra.mxu0 0.0
    %468 = vmatprep.subr.mxu0 0.0
    %469 = vmatpush1.msra.mxu0 0.0
    %470 = vmatprep.subr.mxu0 0.0
    %471 = vmatpush1.msra.mxu0 0.0
    %472 = vmatprep.subr.mxu0 0.0
    %473 = vmatpush1.msra.mxu0 0.0
    %474 = vmatprep.subr.mxu0 0.0
    %475 = vmatpush1.msra.mxu0 0.0
    %476 = vmatprep.subr.mxu0 0.0
    %477 = vmatpush1.msra.mxu0 0.0
    %478 = vmatprep.subr.mxu0 0.0
    %479 = vmatpush1.msra.mxu0 0.0
    %480 = vmatprep.subr.mxu0 0.0
    %481 = vmatpush1.msra.mxu0 0.0
    %482 = vmatprep.subr.mxu0 0.0
    %483 = vmatpush1.msra.mxu0 0.0
    %484 = vmatprep.subr.mxu0 0.0
    %485 = vmatpush1.msra.mxu0 0.0
    %486 = vmatprep.subr.mxu0 0.0
    %487 = vmatpush1.msra.mxu0 0.0
    %488 = vmatprep.mubr.f32.mxu0 0.0
    %489 = vmatmul.mubr.f32.gmra.mrb[0].mxu0 %v422
    %v490 = vpop.f32.mrb[0].mxu0
    %v491 = vadd.f32 %v419, %v490
    %v492 = vpop.f32.mrb[0].mxu0
    %493 = vdwg.mxu0
    %v494 = vld [vmem:[%s10] sm:$0x1]
    %v495 = vsel %vm75, %v491, 0.0
    %v496 = vrot.slane %v495, 4
    %v497 = vadd.f32 %v495, %v496
    %v498 = vrot.slane %v497, 2
    %v499 = vadd.f32 %v497, %v498
    %v500 = vrot.slane %v499, 1
    %v501 = vadd.f32 %v499, %v500
    %v502 = vmul.f32 %v501, %v358
    %v503 = vsub.f32 %v491, %v502
    %v504 = vmul.f32 %v503, %v503
    %v505 = vsel %vm75, %v504, 0.0
    %v506 = vrot.slane %v505, 4
    %v507 = vadd.f32 %v505, %v506
    %v508 = vrot.slane %v507, 2
    %v509 = vadd.f32 %v507, %v508
    %v510 = vrot.slane %v509, 1
    %v511 = vadd.f32 %v509, %v510
    %v512 = vmul.f32 %v511, %v358
    %v513 = vadd.f32 %v512, 0.001
    %v514 = vrsqrt.pop %v513
    %v515 = vmul.f32 %v503, %v514
    %v517 = vlaneseq
    %v518 = vshrl.u32 %v517, 7
    %v519 = vsub.s32 0, %v518
    %v520 = vrot.slane %v494, %v519
    %v522 = vadd.f32 %v515, %v520
    %v523 = vsel %vm75, %v522, -inf
    %524 = vmax.xlane.f32.xlu0 %v523
    %v525 = vpop.xlane.xlu0 %524
    %v526 = vsub.f32 %v522, %v525
    %v527 = vmul.f32 %v526, 1.442695
    %v528 = vpow.pop %v527
    %v529 = vsel %vm75, %v528, 0.0
    %530 = vadd.xlane.f32.xlu0 %v529
    %v531 = vpop.xlane.xlu0 %530
    %v532 = vrcp.pop %v531
    %v533 = vmul.f32 %v528, %v532
    %v534 = vld [vmem:[%s11] sm:$0xff]
    %v535 = vld [vmem:[%s11 + $0x8] sm:$0xff]
    %v536 = vld [vmem:[%s12] sm:$0x1]
    %v538 = vlaneseq
    %v539 = vshrl.u32 %v538, 7
    %v540 = vsub.s32 0, %v539
    %v541 = vrot.slane %v536, %v540
    %543 = vmatprep.subr.mxu0 0.0
    %544 = vmatpush1.msra.mxu0 %v534
    %545 = vmatprep.subr.mxu0 0.0
    %546 = vmatpush1.msra.mxu0 %v535
    %547 = vmatprep.subr.mxu0 0.0
    %548 = vmatpush1.msra.mxu0 0.0
    %549 = vmatprep.subr.mxu0 0.0
    %550 = vmatpush1.msra.mxu0 0.0
    %551 = vmatprep.subr.mxu0 0.0
    %552 = vmatpush1.msra.mxu0 0.0
    %553 = vmatprep.subr.mxu0 0.0
    %554 = vmatpush1.msra.mxu0 0.0
    %555 = vmatprep.subr.mxu0 0.0
    %556 = vmatpush1.msra.mxu0 0.0
    %557 = vmatprep.subr.mxu0 0.0
    %558 = vmatpush1.msra.mxu0 0.0
    %559 = vmatprep.subr.mxu0 0.0
    %560 = vmatpush1.msra.mxu0 0.0
    %561 = vmatprep.subr.mxu0 0.0
    %562 = vmatpush1.msra.mxu0 0.0
    %563 = vmatprep.subr.mxu0 0.0
    %564 = vmatpush1.msra.mxu0 0.0
    %565 = vmatprep.subr.mxu0 0.0
    %566 = vmatpush1.msra.mxu0 0.0
    %567 = vmatprep.subr.mxu0 0.0
    %568 = vmatpush1.msra.mxu0 0.0
    %569 = vmatprep.subr.mxu0 0.0
    %570 = vmatpush1.msra.mxu0 0.0
    %571 = vmatprep.subr.mxu0 0.0
    %572 = vmatpush1.msra.mxu0 0.0
    %573 = vmatprep.subr.mxu0 0.0
    %574 = vmatpush1.msra.mxu0 0.0
    %575 = vmatprep.subr.mxu0 0.0
    %576 = vmatpush1.msra.mxu0 0.0
    %577 = vmatprep.subr.mxu0 0.0
    %578 = vmatpush1.msra.mxu0 0.0
    %579 = vmatprep.subr.mxu0 0.0
    %580 = vmatpush1.msra.mxu0 0.0
    %581 = vmatprep.subr.mxu0 0.0
    %582 = vmatpush1.msra.mxu0 0.0
    %583 = vmatprep.subr.mxu0 0.0
    %584 = vmatpush1.msra.mxu0 0.0
    %585 = vmatprep.subr.mxu0 0.0
    %586 = vmatpush1.msra.mxu0 0.0
    %587 = vmatprep.subr.mxu0 0.0
    %588 = vmatpush1.msra.mxu0 0.0
    %589 = vmatprep.subr.mxu0 0.0
    %590 = vmatpush1.msra.mxu0 0.0
    %591 = vmatprep.subr.mxu0 0.0
    %592 = vmatpush1.msra.mxu0 0.0
    %593 = vmatprep.subr.mxu0 0.0
    %594 = vmatpush1.msra.mxu0 0.0
    %595 = vmatprep.subr.mxu0 0.0
    %596 = vmatpush1.msra.mxu0 0.0
    %597 = vmatprep.subr.mxu0 0.0
    %598 = vmatpush1.msra.mxu0 0.0
    %599 = vmatprep.subr.mxu0 0.0
    %600 = vmatpush1.msra.mxu0 0.0
    %601 = vmatprep.subr.mxu0 0.0
    %602 = vmatpush1.msra.mxu0 0.0
    %603 = vmatprep.subr.mxu0 0.0
    %604 = vmatpush1.msra.mxu0 0.0
    %605 = vmatprep.subr.mxu0 0.0
    %606 = vmatpush1.msra.mxu0 0.0
    %607 = vmatprep.mubr.f32.mxu0 0.0
    %608 = vmatmul.mubr.f32.gmra.mrb[0].mxu0 %v422
    %v609 = vpop.f32.mrb[0].mxu0
    %v610 = vadd.f32 %v541, %v609
    %v611 = vpop.f32.mrb[0].mxu0
    %612 = vdwg.mxu0
    %v613 = vmax.f32 %v610, 0.0
    %vm614 = vcmp.ne.f32.partialorder %v610, %v610
    %v615 = vadd.f32 %v610, 0.0
    %v616 = vand.u32 2147483647, %v610
    %v617 = vsub.f32 0.0, %v616
    %v618 = vmul.f32 %v617, 1.442695
    %v619 = vpow.pop %v618
    %v620 = vadd.f32 %v619, 1.0
    %v621 = vlog2.pop %v620
    %v622 = vmul.f32 %v621, 0.6931472
    %v623 = vmul.f32 -0.5, %v619
    %v624 = vadd.f32 %v623, 1.0
    %v625 = vmul.f32 %v624, %v619
    %v626 = vand.u32 2147483647, %v619
    %vm627 = vcmp.lt.f32.partialorder %v626, 0.0004427343
    %v628 = vsel %vm627, %v625, %v622
    %v629 = vadd.f32 %v613, %v628
    %v630 = vsel %vm614, %v615, %v629
    %v631 = vld [vmem:[%s13] sm:$0xff]
    %v632 = vld [vmem:[%s13 + $0x8] sm:$0xff]
    %v633 = vld [vmem:[%s14] sm:$0x1]
    %v635 = vlaneseq
    %v636 = vshrl.u32 %v635, 7
    %v637 = vsub.s32 0, %v636
    %v638 = vrot.slane %v633, %v637
    %v641 = vsel %vm400, %v630, 0
    %643 = vmatprep.subr.mxu0 0.0
    %644 = vmatpush1.msra.mxu0 %v631
    %645 = vmatprep.subr.mxu0 0.0
    %646 = vmatpush1.msra.mxu0 %v632
    %647 = vmatprep.subr.mxu0 0.0
    %648 = vmatpush1.msra.mxu0 0.0
    %649 = vmatprep.subr.mxu0 0.0
    %650 = vmatpush1.msra.mxu0 0.0
    %651 = vmatprep.subr.mxu0 0.0
    %652 = vmatpush1.msra.mxu0 0.0
    %653 = vmatprep.subr.mxu0 0.0
    %654 = vmatpush1.msra.mxu0 0.0
    %655 = vmatprep.subr.mxu0 0.0
    %656 = vmatpush1.msra.mxu0 0.0
    %657 = vmatprep.subr.mxu0 0.0
    %658 = vmatpush1.msra.mxu0 0.0
    %659 = vmatprep.subr.mxu0 0.0
    %660 = vmatpush1.msra.mxu0 0.0
    %661 = vmatprep.subr.mxu0 0.0
    %662 = vmatpush1.msra.mxu0 0.0
    %663 = vmatprep.subr.mxu0 0.0
    %664 = vmatpush1.msra.mxu0 0.0
    %665 = vmatprep.subr.mxu0 0.0
    %666 = vmatpush1.msra.mxu0 0.0
    %667 = vmatprep.subr.mxu0 0.0
    %668 = vmatpush1.msra.mxu0 0.0
    %669 = vmatprep.subr.mxu0 0.0
    %670 = vmatpush1.msra.mxu0 0.0
    %671 = vmatprep.subr.mxu0 0.0
    %672 = vmatpush1.msra.mxu0 0.0
    %673 = vmatprep.subr.mxu0 0.0
    %674 = vmatpush1.msra.mxu0 0.0
    %675 = vmatprep.subr.mxu0 0.0
    %676 = vmatpush1.msra.mxu0 0.0
    %677 = vmatprep.subr.mxu0 0.0
    %678 = vmatpush1.msra.mxu0 0.0
    %679 = vmatprep.subr.mxu0 0.0
    %680 = vmatpush1.msra.mxu0 0.0
    %681 = vmatprep.subr.mxu0 0.0
    %682 = vmatpush1.msra.mxu0 0.0
    %683 = vmatprep.subr.mxu0 0.0
    %684 = vmatpush1.msra.mxu0 0.0
    %685 = vmatprep.subr.mxu0 0.0
    %686 = vmatpush1.msra.mxu0 0.0
    %687 = vmatprep.subr.mxu0 0.0
    %688 = vmatpush1.msra.mxu0 0.0
    %689 = vmatprep.subr.mxu0 0.0
    %690 = vmatpush1.msra.mxu0 0.0
    %691 = vmatprep.subr.mxu0 0.0
    %692 = vmatpush1.msra.mxu0 0.0
    %693 = vmatprep.subr.mxu0 0.0
    %694 = vmatpush1.msra.mxu0 0.0
    %695 = vmatprep.subr.mxu0 0.0
    %696 = vmatpush1.msra.mxu0 0.0
    %697 = vmatprep.subr.mxu0 0.0
    %698 = vmatpush1.msra.mxu0 0.0
    %699 = vmatprep.subr.mxu0 0.0
    %700 = vmatpush1.msra.mxu0 0.0
    %701 = vmatprep.subr.mxu0 0.0
    %702 = vmatpush1.msra.mxu0 0.0
    %703 = vmatprep.subr.mxu0 0.0
    %704 = vmatpush1.msra.mxu0 0.0
    %705 = vmatprep.subr.mxu0 0.0
    %706 = vmatpush1.msra.mxu0 0.0
    %707 = vmatprep.mubr.f32.mxu0 0.0
    %708 = vmatmul.mubr.f32.gmra.mrb[0].mxu0 %v641
    %v709 = vpop.f32.mrb[0].mxu0
    %v710 = vadd.f32 %v638, %v709
    %v711 = vpop.f32.mrb[0].mxu0
    %712 = vdwg.mxu0
    %v713 = vsel %vm190, %v710, -inf
    %714 = vmax.xlane.f32.xlu0 %v713
    %v715 = vpop.xlane.xlu0 %714
    %v716 = vsub.f32 %v710, %v715
    %v717 = vmul.f32 %v716, 1.442695
    %v718 = vpow.pop %v717
    %v719 = vsel %vm190, %v718, 0.0
    %720 = vadd.xlane.f32.xlu0 %v719
    %v721 = vpop.xlane.xlu0 %720
    %v722 = vrcp.pop %v721
    %v723 = vmul.f32 %v718, %v722
    %v724 = vadd.f32 %v533, 1e-10
    %v725 = vlog2.pop %v724
    %v726 = vmul.f32 %v725, 0.6931472
    %v727 = vmul.f32 %v65, %v726
    %v728 = vsel %vm75, %v727, 0.0
    %729 = vadd.xlane.f32.xlu0 %v728
    %v730 = vpop.xlane.xlu0 %729
    %v731 = vsub.f32 0.0, %v730
    %v732 = vadd.f32 %v723, 1e-10
    %v733 = vlog2.pop %v732
    %v734 = vmul.f32 %v733, 0.6931472
    %v735 = vmul.f32 %v66, %v734
    %v736 = vsel %vm190, %v735, 0.0
    %737 = vadd.xlane.f32.xlu0 %v736
    %v738 = vpop.xlane.xlu0 %737
    %v739 = vsub.f32 %v731, %v738
    %v740 = vld [vmem:[%s17] sm:$0x1]
    %v742 = vlaneseq
    %v743 = vshrl.u32 %v742, 7
    %v744 = vsub.s32 0, %v743
    %v745 = vrot.slane %v740, %v744
    %747 = vrot.lane.b32.xlu0 %v745, 16
    %v748 = vpop.permute.xlu0 %747
    %v750 = vmul.f32 %v381, %v748
    %v751 = vld [vmem:[%s15] sm:$0x1]
    %v753 = vlaneseq
    %v754 = vshrl.u32 %v753, 7
    %v755 = vsub.s32 0, %v754
    %v756 = vrot.slane %v751, %v755
    %v758 = vsub.f32 %v379, %v756
    %v759 = vmul.f32 %v758, %v758
    %v760 = vmul.f32 %v759, %v745
    %v761 = vld [vmem:[%s16] sm:$0x1]
    %v763 = vlaneseq
    %v764 = vshrl.u32 %v763, 7
    %v765 = vsub.s32 0, %v764
    %v766 = vrot.slane %v761, %v765
    %769 = vrot.lane.b32.xlu0 %v379, 112
    %v770 = vpop.permute.xlu0 %769
    %v772 = vsub.f32 %v766, %v770
    %774 = vrot.lane.b32.xlu0 %v760, 16
    %v775 = vpop.permute.xlu0 %774
    %v777 = vadd.f32 %v750, %v775
    %779 = vrot.lane.b32.xlu0 %v772, 16
    %v780 = vpop.permute.xlu0 %779
    %v782 = vadd.f32 %v777, %v780
    %784 = vrot.lane.b32.xlu0 %v782, 112
    %v785 = vpop.permute.xlu0 %784
    %v787 = vsel %vm400, %v785, 0.0
    %788 = vadd.xlane.f32.xlu0 %v787
    %v789 = vpop.xlane.xlu0 %788
    %v790 = vsub.f32 %v789, 16.0
    %v791 = vmul.f32 %v790, 0.5
    %v792 = vadd.f32 %v739, %v791
    %vm793 = vcmask 7168
    %v794 = vsel %vm793, %v792, 0.0
    %795 = vadd.xlane.f32.xlu0 %v794
    %v796 = vpop.xlane.xlu0 %795
    %v797 = vrot.slane %v796, 4
    %v798 = vadd.f32 %v796, %v797
    %v799 = vrot.slane %v798, 2
    %v800 = vadd.f32 %v798, %v799
    %v801 = vrot.slane %v800, 1
    %v802 = vadd.f32 %v800, %v801
    %s803 = vtos %v802
    %s804 = smul.f32 %s803, 0.125
    %v805 = vsel %vm793, %v739, 0.0
    %806 = vadd.xlane.f32.xlu0 %v805
    %v807 = vpop.xlane.xlu0 %806
    %v808 = vrot.slane %v807, 4
    %v809 = vadd.f32 %v807, %v808
    %v810 = vrot.slane %v809, 2
    %v811 = vadd.f32 %v809, %v810
    %v812 = vrot.slane %v811, 1
    %v813 = vadd.f32 %v811, %v812
    %s814 = vtos %v813
    %s815 = smul.f32 %s814, 0.125
    %v816 = vsel %vm793, %v791, 0.0
    %817 = vadd.xlane.f32.xlu0 %v816
    %v818 = vpop.xlane.xlu0 %817
    %v819 = vrot.slane %v818, 4
    %v820 = vadd.f32 %v818, %v819
    %v821 = vrot.slane %v820, 2
    %v822 = vadd.f32 %v820, %v821
    %v823 = vrot.slane %v822, 1
    %v824 = vadd.f32 %v822, %v823
    %s825 = vtos %v824
    %s826 = smul.f32 %s825, 0.125
    %827 = vst.msk [vmem:[#allocation2] sm:$0xff] %vm400, %v411
    %828 = vst.msk [vmem:[#allocation4] sm:$0xff] %vm75, %v533
    %829 = vst.msk [vmem:[%s20] sm:$0xff] %vm190, %v723
    %v830 = vlaneseq
    %v831 = vand.u32 %v830, 127
    %vm832 = vcmp.eq.s32.totalorder %v831, 0
    %vm833 = vcmp.eq.s32.totalorder %v831, 1
    %vm834 = vcmp.eq.s32.totalorder %v831, 2
    %v835 = vstv %s826
    %v836 = vsel %vm834, %v835, 0.0
    %v837 = vstv %s815
    %v838 = vsel %vm833, %v837, %v836
    %v839 = vstv %s804
    %v840 = vsel %vm832, %v839, %v838
    %841 = vst [vmem:[%s21] sm:$0x1] %v840
    // Predicated region
    $region74: #{scholar_forward.1} parent=1 // pred_check
      _
    $region75: #{scholar_forward.1} parent=1 // pred_check_branch
      %843 = sbr.rel (0) target = $region77
    $region76: #{scholar_forward.1} parent=1 // pred_region
      %s845 = ssub.s32 128, 128
      %846 = vsyncadd [#allocation3], %s845
      %s848 = sshll.u32 [#allocation2], 4
      %s849 = int_to_ptr.vmem [resolvable:$true] %s848
      %851 = dma.vmem_to_hbm [thread:$0]  %s849, 128, %s18, [#allocation3]
    $region77: #{scholar_forward.1} parent=1 // pred_fallthru
      _
    // Predicated region
    $region78: #{scholar_forward.1} parent=1 // pred_check
      _
    $region79: #{scholar_forward.1} parent=1 // pred_check_branch
      %853 = sbr.rel (0) target = $region81
    $region80: #{scholar_forward.1} parent=1 // pred_region
      %s855 = ssub.s32 128, 128
      %856 = vsyncadd [#allocation5], %s855
      %s858 = sshll.u32 [#allocation4], 4
      %s859 = int_to_ptr.vmem [resolvable:$true] %s858
      %861 = dma.vmem_to_hbm [thread:$0]  %s859, 128, %s19, [#allocation5]
    $region81: #{scholar_forward.1} parent=1 // pred_fallthru
      _
    // Predicated region
    $region82: #{scholar_forward.1} parent=1 // pred_check
      _
    $region83: #{scholar_forward.1} parent=1 // pred_check_branch
      %863 = sbr.rel (0) target = $region85
    $region84: #{scholar_forward.1} parent=1 // pred_region
      _
    $region85: #{scholar_forward.1} parent=1 // pred_fallthru
      _
    // Predicated region
    $region86: #{scholar_forward.1} parent=1 // pred_check
      _
    $region87: #{scholar_forward.1} parent=1 // pred_check_branch
      %865 = sbr.rel (0) target = $region89
    $region88: #{scholar_forward.1} parent=1 // pred_region
      _
    $region89: #{scholar_forward.1} parent=1 // pred_fallthru
      _
    // Predicated region
    $region90: #{scholar_forward.1} parent=1 // pred_check
      _
    $region91: #{scholar_forward.1} parent=1 // pred_check_branch
      %867 = sbr.rel (0) target = $region93
    $region92: #{scholar_forward.1} parent=1 // pred_region
      %868 = dma.done [#allocation3], 128
    $region93: #{scholar_forward.1} parent=1 // pred_fallthru
      _
    // Predicated region
    $region94: #{scholar_forward.1} parent=1 // pred_check
      _
    $region95: #{scholar_forward.1} parent=1 // pred_check_branch
      %870 = sbr.rel (0) target = $region97
    $region96: #{scholar_forward.1} parent=1 // pred_region
      %871 = dma.done [#allocation5], 128
    $region97: #{scholar_forward.1} parent=1 // pred_fallthru
      _
    // Predicated region
    $region98: #{scholar_forward.1} parent=1 // pred_check
      _
    $region99: #{scholar_forward.1} parent=1 // pred_check_branch
      %873 = sbr.rel (0) target = $region101
    $region100: #{scholar_forward.1} parent=1 // pred_region
      _
    $region101: #{scholar_forward.1} parent=1 // pred_fallthru
      _
    // Predicated region
    $region102: #{scholar_forward.1} parent=1 // pred_check
      _
    $region103: #{scholar_forward.1} parent=1 // pred_check_branch
      %875 = sbr.rel (0) target = $region105
    $region104: #{scholar_forward.1} parent=1 // pred_region
      _
    $region105: #{scholar_forward.1} parent=1 // pred_fallthru
      _
    %876 = vsyncpa [#allocation3], 1
    %877 = vsyncpa [#allocation5], 1

</llo_original>
